<compile_context>
chip_gen: v7x
topology: tpu7x:2x2x1
jax: 0.10.0
libtpu: 0.0.40
codegen_flags: <defaults>
</compile_context>

<pallas_src>
import functools

import jax
import jax.numpy as jnp
from jax.experimental import pallas as pl
from jax.experimental.pallas import tpu as pltpu


def _gather_origins_kernel(count_ref, pts_hbm, out_ref, copy_sem):
    """Copy batch `count-1` (an (8, 3*B/8) slab) straight from HBM to the
    output's VMEM buffer with one DMA.  No vector loads/stores at all."""
    batch_idx = count_ref[0] - 1                      # 1-indexed counter -> row block
    cp = pltpu.make_async_copy(pts_hbm.at[batch_idx], out_ref, copy_sem)
    cp.start()
    cp.wait()


@functools.partial(jax.jit, static_argnames=("ray_batch_size", "use_pallas"))
def orthographic_ray_generator(surface_points, plane_normal, count, *,
                               ray_batch_size, use_pallas=None):
    """Pallas-backed equivalent of OrthographicRayGenerator.forward(count).

    Args:
      surface_points: (N, 3) float32, N % ray_batch_size == 0.
      plane_normal:   (1, 3) float32 (un-normalized).
      count:          int32 scalar (1-indexed batch counter, as in the module).
      ray_batch_size: static python int B (multiple of 8).
      use_pallas:     static; None = auto (Pallas only for slabs >= 1 MiB),
                      True/False to force.

    Returns:
      (origins, directions, pixel_area, nears, fars)
    """
    n_points, dim = surface_points.shape
    assert dim == 3
    b = ray_batch_size
    assert b % 8 == 0, "ray_batch_size must be a multiple of 8 (f32 sublane tiling)"
    assert n_points % b == 0, "ragged last batch not supported (see TODO above)"

    surface_points = surface_points.astype(jnp.float32)
    plane_normal = plane_normal.astype(jnp.float32)

    num_batches = n_points // b
    count_clipped = jnp.clip(jnp.asarray(count, jnp.int32), 1, num_batches)

    # ---- constant-per-call outputs: plain XLA (cheap, fuses with consumers) ----
    nrm = jnp.sqrt(jnp.sum(plane_normal * plane_normal))          # ||plane_normal||
    unit = plane_normal / jnp.maximum(nrm, jnp.float32(1e-12))    # F.normalize eps
    directions = jnp.broadcast_to(unit, (b, 3))
    pixel_area = jnp.zeros((b, 1), jnp.float32)
    nears = jnp.zeros((b, 1), jnp.float32)
    fars = jnp.full((b, 1), nrm, dtype=jnp.float32)

    # ---- data-dependent gather of the origins ----
    slab_bytes = 3 * b * 4
    if use_pallas is None:
        use_pallas = slab_bytes >= (1 << 20)   # tiny slabs: dynamic_slice is cheaper

    if not use_pallas:
        # Fast path: one fused dynamic slice, no custom call overhead.
        start = b * (count_clipped - 1)
        origins = jax.lax.dynamic_slice(surface_points, (start, jnp.int32(0)), (b, 3))
        return origins, directions, pixel_area, nears, fars

    # Pallas path: each batch of B points = 3*B contiguous f32 = exactly one
    # (8, 3*B/8) slab in this (free) row-major reshape.  One DMA moves it.
    lane_w = (3 * b) // 8
    pts_3d = surface_points.reshape(num_batches, 8, lane_w)
    count_arr = count_clipped.reshape((1,))

    grid_spec = pltpu.PrefetchScalarGridSpec(
        num_scalar_prefetch=1,
        grid=(1,),
        in_specs=[
            pl.BlockSpec(memory_space=pl.ANY),          # raw HBM ref, manual DMA
        ],
        out_specs=pl.BlockSpec((8, lane_w), lambda i, cnt: (0, 0)),
        scratch_shapes=[pltpu.SemaphoreType.DMA(())],
    )

    origins_flat = pl.pallas_call(
        _gather_origins_kernel,
        out_shape=jax.ShapeDtypeStruct((8, lane_w), jnp.float32),
        grid_spec=grid_spec,
    )(count_arr, pts_3d)

    origins = origins_flat.reshape(b, 3)   # free reshape back to the public layout
    return origins, directions, pixel_area, nears, fars


if __name__ == "__main__":
    key = jax.random.PRNGKey(0)
    k_pts, k_nrm = jax.random.split(key)

    n_points = 4096
    ray_batch_size = 1024      # slab = 12 KiB; Pallas path forced for the demo
    count = 2                  # selects rows [1024:2048]

    surface_points = jax.random.normal(k_pts, (n_points, 3), dtype=jnp.float32)
    plane_normal = jax.random.normal(k_nrm, (1, 3), dtype=jnp.float32)

    # --- Pallas (direct-DMA) path ---
    origins, directions, pixel_area, nears, fars = jax.block_until_ready(
        orthographic_ray_generator(surface_points, plane_normal, jnp.int32(count),
                                   ray_batch_size=ray_batch_size, use_pallas=True))

    # Pure-JAX reference check (same math as the PyTorch module).
    start = ray_batch_size * (count - 1)
    end = ray_batch_size * count
    ref_origins = surface_points[start:end]
    nrm = jnp.linalg.norm(plane_normal)
    ref_dirs = jnp.broadcast_to(plane_normal / jnp.maximum(nrm, 1e-12),
                                (ray_batch_size, 3))
    assert jnp.allclose(origins, ref_origins, atol=1e-6)
    assert jnp.allclose(directions, ref_dirs, atol=1e-6)
    assert jnp.allclose(pixel_area, jnp.zeros((ray_batch_size, 1)), atol=0)
    assert jnp.allclose(nears, jnp.zeros((ray_batch_size, 1)), atol=0)
    assert jnp.allclose(fars, jnp.full((ray_batch_size, 1), nrm), atol=1e-6)

    # --- small-batch fast path (plain XLA dynamic_slice), equivalence check ---
    fp = jax.block_until_ready(
        orthographic_ray_generator(surface_points, plane_normal, jnp.int32(3),
                                   ray_batch_size=ray_batch_size, use_pallas=False))
    assert jnp.allclose(fp[0], surface_points[2048:3072], atol=1e-6)

    print("KERNEL_OK")
</pallas_src>

<mosaic_0001>
module attributes {stable_mosaic.version = 11 : i64} {
  func.func @_gather_origins_kernel(%arg0: i32, %arg1: memref<1xi32, #tpu.memory_space<smem>>, %arg2: memref<4x8x384xf32, #tpu.memory_space<any>>, %arg3: memref<8x384xf32, #tpu.memory_space<vmem>>, %arg4: memref<!tpu.dma_semaphore, #tpu.memory_space<semaphore_mem>>) attributes {dimension_semantics = [#tpu.dimension_semantics<arbitrary>], iteration_bounds = array<i64: 1>, scalar_prefetch = 1 : i64, scratch_operands = 1 : i64, tpu.core_type = #tpu.core_type<tc>, window_params = [{}, {pipeline_mode = #tpu.pipeline_mode<synchronous>, transform_indices = @transform_1, window_bounds = array<i64: 8, 384>}]} {
    %c0 = arith.constant 0 : index
    %0 = memref.load %arg1[%c0] : memref<1xi32, #tpu.memory_space<smem>>
    %c1_i32 = arith.constant 1 : i32
    %1 = arith.subi %0, %c1_i32 : i32
    %c0_i32 = arith.constant 0 : i32
    %c0_i32_0 = arith.constant 0 : i32
    %2 = tpu.memref_slice %arg2[%1, %c0_i32, %c0_i32_0] : memref<4x8x384xf32, #tpu.memory_space<any>> -> memref<1x8x384xf32, #tpu.memory_space<any>>
    %3 = tpu.memref_squeeze %2 : memref<1x8x384xf32, #tpu.memory_space<any>> -> memref<8x384xf32, #tpu.memory_space<any>>
    tpu.enqueue_dma source(%3 : memref<8x384xf32, #tpu.memory_space<any>>) target(%arg3 : memref<8x384xf32, #tpu.memory_space<vmem>>) target_semaphore(%arg4 : memref<!tpu.dma_semaphore, #tpu.memory_space<semaphore_mem>>)
    %c0_i32_1 = arith.constant 0 : i32
    %c0_i32_2 = arith.constant 0 : i32
    %4 = tpu.memref_slice %arg2[%1, %c0_i32_1, %c0_i32_2] : memref<4x8x384xf32, #tpu.memory_space<any>> -> memref<1x8x384xf32, #tpu.memory_space<any>>
    %5 = tpu.memref_squeeze %4 : memref<1x8x384xf32, #tpu.memory_space<any>> -> memref<8x384xf32, #tpu.memory_space<any>>
    tpu.wait_dma2 semaphore(%arg4 : memref<!tpu.dma_semaphore, #tpu.memory_space<semaphore_mem>>) src(%5 : memref<8x384xf32, #tpu.memory_space<any>>) dst(%arg3 : memref<8x384xf32, #tpu.memory_space<vmem>>)
    return
  }
  func.func @transform_1(%arg0: i32, %arg1: memref<1xi32, #tpu.memory_space<smem>>) -> (i32, i32) {
    %c0_i32 = arith.constant 0 : i32
    %c0_i32_0 = arith.constant 0 : i32
    %c0_i32_1 = arith.constant 0 : i32
    return %c0_i32, %c0_i32_0 : i32, i32
  }
}

</mosaic_0001>

<llo_original>
// kernel: orthographic_ray_generator.1
$region0: #{orthographic_ray_generator.1}
  #allocation0 [shape = 'u32[]', space=smem, size = 0x4, offset = 0x4, fixed_abs, tag = 'smem constant byte address 0x4 - core index']
  #allocation1 [shape = 'u32[144,128]{1,0:T(1,128)}', space=vmem, size = 0x12000, scoped, tag = 'internal scratch']
  #allocation2 [shape = 's32[1]{0}', space=sflag, size = 0x4, scoped, tag = 'scratch operand']
  #allocation3 [shape = 's32[1]{0}', space=sflag, size = 0x4, scoped, tag = 'scoped memory for orthographic_ray_generator.1']
  #allocation4 [shape = 's32[1]{0:T(128)S(6)}', space=smem, size = 0x200, scoped, tag = 'prefetched SMEM operand 0']
  #allocation5 [shape = 's32[]', space=sflag, size = 0x4, offset = 0, fixed_abs, tag = 'sflag constant byte address 0x0 - dummy sync flag']
  %s0 = inlined_call_operand.<no memory space> [shape: s32[1], index: 0, kind: input, shape index: {}]
  %s1 = inlined_call_operand.vmem [shape: f32[4,8,384], index: 1, kind: input, shape index: {}]
  %s2 = inlined_call_operand.vmem [shape: f32[8,384], index: 2, kind: output, shape index: {}]
  %s3 = sld [smem:[#allocation0]]
  $region44: #{orthographic_ray_generator.1} parent=0
    _
  %s5 = ssub.s32 1, %s3
  %s6 = scalar_select 0, %s5, %s3
  %7 = sst [smem:[#allocation4]] %s0
  %s8 = sld [smem:[#allocation4]]
  %s9 = ssub.s32 %s8, 1
  %s10 = smul.u32 %s9, 3
  %s11 = smul.addr %s10, 8
  %s12 = scalar_lea.vmem %s1, %s11
  %p14 = scmp.lt.u32.totalorder 24, 8
  %p15 = pneg %p14
  // Predicated region
  $region2: #{orthographic_ray_generator.1} parent=0 // pred_check
    _
  $region3: #{orthographic_ray_generator.1} parent=0 // pred_check_branch
    %17 = sbr.rel (%p14) target = $region5
  $region4: #{orthographic_ray_generator.1} parent=0 // pred_region
    %s32 = sand.u32 24, 7
    %p33 = scmp.eq.s32.totalorder %s32, 0
    // Predicated region
    $region17: #{orthographic_ray_generator.1} parent=4 // pred_check
      %p34 = pneg %p33
    $region18: #{orthographic_ray_generator.1} parent=4 // pred_check_branch
      %36 = sbr.rel (%p34) target = $region20
    $region19: #{orthographic_ray_generator.1} parent=4 // pred_region
      loop: start=0, step=1, limit=1
      $region21: #{orthographic_ray_generator.1} parent=19 // loop_pre_header
        _
      $region22: #{orthographic_ray_generator.1} parent=19 // loop_header
        %s38 = sphi 0, %s42
        %p39 = scmp.ge.s32.totalorder %s38, 1
        %s43 = sphi %s12, %s12
        %s44 = sphi %s2, %s2
      $region23: #{orthographic_ray_generator.1} parent=19 // loop_header_branch
        %41 = sbr.rel (%p39) target = $region27
      $region24: #{orthographic_ray_generator.1} parent=19 // loop_body
        %v45 = vld [vmem:[%s43] sm:$0xff]
        %46 = vst [vmem:[%s44] sm:$0xff] %v45
        %v47 = vld [vmem:[%s43 + $0x8] sm:$0xff]
        %48 = vst [vmem:[%s44 + $0x8] sm:$0xff] %v47
        %v49 = vld [vmem:[%s43 + $0x10] sm:$0xff]
        %50 = vst [vmem:[%s44 + $0x10] sm:$0xff] %v49
      $region25: #{orthographic_ray_generator.1} parent=19 // loop_footer
        %s42 = sadd.s32 1, %s38
      $region26: #{orthographic_ray_generator.1} parent=19 // loop_footer_branch
        %37 = sbr.rel target = $region22
      $region27: #{orthographic_ray_generator.1} parent=19 // loop_exit
        _
    $region20: #{orthographic_ray_generator.1} parent=4 // pred_fallthru
      _
    %p51 = pneg %p33
    // Predicated region
    $region28: #{orthographic_ray_generator.1} parent=4 // pred_check
      _
    $region29: #{orthographic_ray_generator.1} parent=4 // pred_check_branch
      %53 = sbr.rel (%p33) target = $region31
    $region30: #{orthographic_ray_generator.1} parent=4 // pred_region
      %s54 = sand.u32 24, 7
    $region31: #{orthographic_ray_generator.1} parent=4 // pred_fallthru
      _
  $region5: #{orthographic_ray_generator.1} parent=0 // pred_fallthru
    _
  // Predicated region
  $region6: #{orthographic_ray_generator.1} parent=0 // pred_check
    %p18 = pneg %p14
  $region7: #{orthographic_ray_generator.1} parent=0 // pred_check_branch
    %20 = sbr.rel (%p18) target = $region9
  $region8: #{orthographic_ray_generator.1} parent=0 // pred_region
    %s21 = sshllo.u32 0, 24
    loop: start=0, step=1, limit=1
    $region10: #{orthographic_ray_generator.1} parent=8 // loop_pre_header
      _
    $region11: #{orthographic_ray_generator.1} parent=8 // loop_header
      %s23 = sphi 0, %s27
      %p24 = scmp.ge.s32.totalorder %s23, 1
      %s28 = sphi %s12, %s12
      %s29 = sphi %s2, %s2
    $region12: #{orthographic_ray_generator.1} parent=8 // loop_header_branch
      %26 = sbr.rel (%p24) target = $region16
    $region13: #{orthographic_ray_generator.1} parent=8 // loop_body
      %v30 = vld [vmem:[%s28] sm:%s21]
      %31 = vst [vmem:[%s29] sm:%s21] %v30
    $region14: #{orthographic_ray_generator.1} parent=8 // loop_footer
      %s27 = sadd.s32 1, %s23
    $region15: #{orthographic_ray_generator.1} parent=8 // loop_footer_branch
      %22 = sbr.rel target = $region11
    $region16: #{orthographic_ray_generator.1} parent=8 // loop_exit
      _
  $region9: #{orthographic_ray_generator.1} parent=0 // pred_fallthru
    _
  // Predicated region
  $region32: #{orthographic_ray_generator.1} parent=0 // pred_check
    _
  $region33: #{orthographic_ray_generator.1} parent=0 // pred_check_branch
    %57 = sbr.rel (0) target = $region35
  $region34: #{orthographic_ray_generator.1} parent=0 // pred_region
    %58 = vsyncadd [#allocation2], 384
  $region35: #{orthographic_ray_generator.1} parent=0 // pred_fallthru
    _
  %s59 = smul.u32 8, 1
  %s60 = smul.u32 %s59, 3
  %s61 = sshll.u32 %s60, 4
  %62 = dma.done [#allocation2], %s61
  // Predicated region
  $region36: #{orthographic_ray_generator.1} parent=0 // pred_check
    _
  $region37: #{orthographic_ray_generator.1} parent=0 // pred_check_branch
    %64 = sbr.rel (0) target = $region39
  $region38: #{orthographic_ray_generator.1} parent=0 // pred_region
    _
  $region39: #{orthographic_ray_generator.1} parent=0 // pred_fallthru
    _
  // Predicated region
  $region40: #{orthographic_ray_generator.1} parent=0 // pred_check
    _
  $region41: #{orthographic_ray_generator.1} parent=0 // pred_check_branch
    %66 = sbr.rel (0) target = $region43
  $region42: #{orthographic_ray_generator.1} parent=0 // pred_region
    _
  $region43: #{orthographic_ray_generator.1} parent=0 // pred_fallthru
    _
  %67 = vsyncmov [#allocation2]
  %s68 = vpop.sfrf %67
  %p69 = scmp.eq.s32.totalorder %s68, 0
  %p70 = pneg %p69
  %72 = shalt.err (%p70)

</llo_original>
